<compile_context>
chip_gen: v7x
topology: tpu7x:2x2x1
jax: 0.10.0
libtpu: 0.0.40
codegen_flags: <defaults>
</compile_context>

<pallas_src>
import functools
import math

import jax
import jax.numpy as jnp
from jax.experimental import pallas as pl
from jax.experimental.pallas import tpu as pltpu


def _round_up(a, b):
    return (a + b - 1) // b * b


def _vmem_capacity_bytes():
    """Best-effort device VMEM capacity query; conservative fallback (v7x=64MiB)."""
    try:
        info = pltpu.get_tpu_info()
        cap = getattr(info, "vmem_capacity_bytes", None)
        if cap:
            return int(cap)
    except Exception:
        pass
    return 64 * 1024 * 1024


def _vmem_footprint(tm, tk, d_model_p, x_bytes, out_bytes, use_acc_scratch):
    """Estimated resident VMEM bytes for one grid step (double-buffered I/O)."""
    db = 2  # BlockSpec double buffering
    total = 0
    total += tm * d_model_p * x_bytes * db           # x tile
    total += tm * d_model_p * out_bytes * db         # out tile
    total += d_model_p * tk * 2 * db                 # w1 chunk (bf16)
    total += tk * d_model_p * 2 * db                 # w2 chunk (bf16)
    total += (tk + 3 * d_model_p) * 4 * db           # b1 + b2 + gamma + beta
    total += tm * d_model_p * 2                      # xn stash (bf16 scratch)
    if use_acc_scratch:
        total += tm * d_model_p * 4                  # f32 accumulator scratch
    return total


def _choose_tiles(n, d_ff_p, d_model_p, x_bytes, out_bytes, use_acc_scratch, budget):
    """Pick (tm, tk): prioritize large row tiles (weight re-streaming intensity
    ~ tm FLOP/byte), then large d_ff chunks (fewer accumulator RMW passes),
    subject to the VMEM budget.  tm is a multiple of 16 (bf16 sublane packing)."""
    n16 = _round_up(max(n, 1), 16)
    tm_opts = sorted({t for t in (1024, 768, 512, 384, 256, 192, 128, 64, 32, 16)
                      if t <= n16} | {min(n16, 1024)}, reverse=True)
    tk_opts = sorted(({t for t in (2048, 1024, 512, 256, 128)
                       if t <= d_ff_p and d_ff_p % t == 0}
                      | ({d_ff_p} if d_ff_p <= 2048 else set())), reverse=True)
    for tm in tm_opts:
        for tk in tk_opts:
            if _vmem_footprint(tm, tk, d_model_p, x_bytes, out_bytes,
                               use_acc_scratch) <= budget:
                return tm, tk
    return tm_opts[-1], tk_opts[-1]


def _ffn_kernel(x_ref, w1_ref, b1_ref, w2_ref, b2_ref, g_ref, beta_ref,
                o_ref, xn_ref, *acc_scratch, eps, d_model):
    # Grid: (row tiles, d_ff chunks).  x / out blocks are constant across k so
    # they stay resident; the accumulator sums the second matmul over k.
    # acc_ref is either a dedicated f32 scratch, or o_ref itself when the
    # output dtype is f32 (slimmer resident set).
    acc_ref = acc_scratch[0] if acc_scratch else o_ref
    k = pl.program_id(1)

    @pl.when(k == 0)
    def _init():
        x = x_ref[...].astype(jnp.float32)                  # (TM, Dp)
        inv_d = 1.0 / d_model
        mu = jnp.sum(x, axis=-1, keepdims=True) * inv_d     # true-d_model mean
        xc = x - mu
        if d_model != x.shape[-1]:                          # lane padding present
            lane = jax.lax.broadcasted_iota(jnp.int32, x.shape, 1)
            xc = jnp.where(lane < d_model, xc, 0.0)
        var = jnp.sum(xc * xc, axis=-1, keepdims=True) * inv_d
        xn = xc * jax.lax.rsqrt(var + eps) * g_ref[...] + beta_ref[...]
        xn_ref[...] = xn.astype(xn_ref.dtype)               # bf16 stash for MXU
        # Fold the residual (raw x) and the w_2 bias into the accumulator init
        # so the final k step needs no extra (TM, Dp) VPU add pass.
        acc_ref[...] = (x + b2_ref[...]).astype(acc_ref.dtype)

    # One d_ff chunk: h = relu(xn @ w1[:, chunk] + b1[chunk]); acc += h @ w2[chunk, :]
    # (d_ff is only a contraction dim for the *second* matmul, so per-chunk
    #  ReLU + accumulation is exact.)
    h = jnp.dot(xn_ref[...], w1_ref[...], preferred_element_type=jnp.float32)
    h = jnp.maximum(h + b1_ref[...], 0.0)                   # (TM, TK) f32
    # dropout_1: identity (eval mode)
    acc_ref[...] += jnp.dot(h.astype(w2_ref.dtype), w2_ref[...],
                            preferred_element_type=jnp.float32).astype(acc_ref.dtype)

    if acc_scratch:
        @pl.when(k == pl.num_programs(1) - 1)
        def _finalize():
            # dropout_2: identity (eval mode); residual + b2 already folded in.
            o_ref[...] = acc_ref[...].astype(o_ref.dtype)


def prepare_ffn_params(w1, b1, w2, b2, gamma, beta, *, weight_dtype=jnp.bfloat16):
    """One-time parameter prep (hoisted out of the per-call hot path):
    pad d_model / d_ff to multiples of 128 and cast weights to bf16.
    Weight layout is (in, out): w1 (d_model, d_ff), w2 (d_ff, d_model) --
    transposed vs. PyTorch nn.Linear storage.  Zero padding is numerically
    inert (padded w1 rows / w2 cols / biases / gamma / beta are 0)."""
    d_model, d_ff = w1.shape
    d_model_p = _round_up(d_model, 128)
    d_ff_p = _round_up(d_ff, 128)
    f32 = jnp.float32
    w1p = jnp.pad(w1, ((0, d_model_p - d_model), (0, d_ff_p - d_ff))).astype(weight_dtype)
    w2p = jnp.pad(w2, ((0, d_ff_p - d_ff), (0, d_model_p - d_model))).astype(weight_dtype)
    b1p = jnp.pad(b1, (0, d_ff_p - d_ff)).reshape(1, d_ff_p).astype(f32)
    b2p = jnp.pad(b2, (0, d_model_p - d_model)).reshape(1, d_model_p).astype(f32)
    gp = jnp.pad(gamma, (0, d_model_p - d_model)).reshape(1, d_model_p).astype(f32)
    bp = jnp.pad(beta, (0, d_model_p - d_model)).reshape(1, d_model_p).astype(f32)
    return (w1p, b1p, w2p, b2p, gp, bp)


def positionwise_feed_forward(x, params, *, eps=1e-6):
    """x: (..., d_model), params: output of prepare_ffn_params."""
    w1p, b1p, w2p, b2p, gp, bp = params
    *lead, d_model = x.shape
    d_model_p, d_ff_p = w1p.shape
    n = math.prod(lead) if lead else 1

    x_bytes = jnp.dtype(x.dtype).itemsize
    out_dtype = x.dtype
    # f32 output -> accumulate directly into o_ref, no separate acc scratch.
    use_acc_scratch = out_dtype != jnp.float32

    # --- tiling under an explicit VMEM budget ------------------------------
    vmem_cap = _vmem_capacity_bytes()
    budget = int(vmem_cap * 0.8)
    tm, tk = _choose_tiles(n, d_ff_p, d_model_p, x_bytes, x_bytes,
                           use_acc_scratch, budget)
    n_p = _round_up(n, tm)

    x2d = x.reshape(n, d_model)
    if (n_p, d_model_p) != (n, d_model):
        x2d = jnp.pad(x2d, ((0, n_p - n), (0, d_model_p - d_model)))

    grid = (n_p // tm, d_ff_p // tk)
    n_row_tiles = grid[0]

    footprint = _vmem_footprint(tm, tk, d_model_p, x_bytes, x_bytes, use_acc_scratch)
    vmem_limit = int(min(vmem_cap, max(footprint + (16 << 20), 32 << 20)))

    # Accurate byte count: weights are re-streamed once per row tile.
    w_itemsize = jnp.dtype(w1p.dtype).itemsize
    cost = pl.CostEstimate(
        flops=4 * n_p * d_model_p * d_ff_p,                     # two matmuls
        transcendentals=n_p,                                    # rsqrt per row
        bytes_accessed=(2 * n_p * d_model_p * x_bytes           # x in + out
                        + (w1p.size + w2p.size) * w_itemsize * n_row_tiles
                        + (b1p.size + b2p.size + gp.size + bp.size) * 4 * n_row_tiles))

    scratch = [pltpu.VMEM((tm, d_model_p), jnp.bfloat16)]       # xn stash (LN result)
    if use_acc_scratch:
        scratch.append(pltpu.VMEM((tm, d_model_p), jnp.float32))

    out2d = pl.pallas_call(
        functools.partial(_ffn_kernel, eps=eps, d_model=d_model),
        out_shape=jax.ShapeDtypeStruct((n_p, d_model_p), out_dtype),
        grid_spec=pltpu.PrefetchScalarGridSpec(
            num_scalar_prefetch=0,
            grid=grid,
            in_specs=[
                pl.BlockSpec((tm, d_model_p), lambda i, k: (i, 0)),   # x rows
                pl.BlockSpec((d_model_p, tk), lambda i, k: (0, k)),   # w1 chunk
                pl.BlockSpec((1, tk),         lambda i, k: (0, k)),   # b1 chunk
                pl.BlockSpec((tk, d_model_p), lambda i, k: (k, 0)),   # w2 chunk
                pl.BlockSpec((1, d_model_p),  lambda i, k: (0, 0)),   # b2
                pl.BlockSpec((1, d_model_p),  lambda i, k: (0, 0)),   # gamma
                pl.BlockSpec((1, d_model_p),  lambda i, k: (0, 0)),   # beta
            ],
            out_specs=pl.BlockSpec((tm, d_model_p), lambda i, k: (i, 0)),
            scratch_shapes=scratch,
        ),
        compiler_params=pltpu.CompilerParams(
            dimension_semantics=("parallel", "arbitrary"),
            vmem_limit_bytes=vmem_limit),
        cost_estimate=cost,
    )(x2d, w1p, b1p, w2p, b2p, gp, bp)

    return out2d[:n, :d_model].reshape(*lead, d_model)


def _reference(x, w1, b1, w2, b2, gamma, beta, eps=1e-6):
    xf = x.astype(jnp.float32)
    mu = jnp.mean(xf, axis=-1, keepdims=True)
    var = jnp.mean((xf - mu) ** 2, axis=-1, keepdims=True)
    xn = (xf - mu) / jnp.sqrt(var + eps) * gamma + beta
    h = jnp.maximum(xn @ w1 + b1, 0.0)
    return (h @ w2 + b2 + xf).astype(x.dtype)


if __name__ == "__main__":
    # Small shapes consistent with the module: (batch, seq, d_model)
    batch, seq, d_model, d_ff = 2, 8, 32, 64

    key = jax.random.PRNGKey(0)
    kx, kw1, kb1, kw2, kb2 = jax.random.split(key, 5)

    x = jax.random.normal(kx, (batch, seq, d_model), dtype=jnp.float32)

    # Deterministic parameter init (kaiming-uniform-ish scale, like nn.Linear).
    lim1 = 1.0 / (d_model ** 0.5)
    lim2 = 1.0 / (d_ff ** 0.5)
    w1 = jax.random.uniform(kw1, (d_model, d_ff), jnp.float32, -lim1, lim1)
    b1 = jax.random.uniform(kb1, (d_ff,), jnp.float32, -lim1, lim1)
    w2 = jax.random.uniform(kw2, (d_ff, d_model), jnp.float32, -lim2, lim2)
    b2 = jax.random.uniform(kb2, (d_model,), jnp.float32, -lim2, lim2)
    gamma = jnp.ones((d_model,), jnp.float32)
    beta = jnp.zeros((d_model,), jnp.float32)

    # One-time param prep (padding + bf16 cast) hoisted out of the hot path.
    params = jax.tree_util.tree_map(jax.block_until_ready,
                                    prepare_ffn_params(w1, b1, w2, b2, gamma, beta))

    ffn = jax.jit(positionwise_feed_forward)
    out = jax.block_until_ready(ffn(x, params))

    ref = _reference(x, w1, b1, w2, b2, gamma, beta)
    assert out.shape == x.shape
    # Tolerance sized for bf16 MXU matmuls with f32 accumulation.
    assert jnp.allclose(out, ref, atol=5e-2, rtol=5e-2), "mismatch vs reference"

    print("KERNEL_OK")
</pallas_src>

<mosaic_0001>
module attributes {stable_mosaic.version = 11 : i64} {
  func.func @_ffn_kernel(%arg0: i32, %arg1: i32, %arg2: memref<16x128xf32, #tpu.memory_space<vmem>>, %arg3: memref<128x128xbf16, #tpu.memory_space<vmem>>, %arg4: memref<1x128xf32, #tpu.memory_space<vmem>>, %arg5: memref<128x128xbf16, #tpu.memory_space<vmem>>, %arg6: memref<1x128xf32, #tpu.memory_space<vmem>>, %arg7: memref<1x128xf32, #tpu.memory_space<vmem>>, %arg8: memref<1x128xf32, #tpu.memory_space<vmem>>, %arg9: memref<16x128xf32, #tpu.memory_space<vmem>>, %arg10: memref<16x128xbf16, #tpu.memory_space<vmem>>) attributes {dimension_semantics = [#tpu.dimension_semantics<parallel>, #tpu.dimension_semantics<arbitrary>], iteration_bounds = array<i64: 1, 1>, scalar_prefetch = 0 : i64, scratch_operands = 1 : i64, tpu.core_type = #tpu.core_type<tc>, window_params = [{transform_indices = @transform_0, window_bounds = array<i64: 16, 128>}, {transform_indices = @transform_1, window_bounds = array<i64: 128, 128>}, {transform_indices = @transform_2, window_bounds = array<i64: 1, 128>}, {transform_indices = @transform_3, window_bounds = array<i64: 128, 128>}, {pipeline_mode = #tpu.pipeline_mode<synchronous>, transform_indices = @transform_4, window_bounds = array<i64: 1, 128>}, {pipeline_mode = #tpu.pipeline_mode<synchronous>, transform_indices = @transform_5, window_bounds = array<i64: 1, 128>}, {pipeline_mode = #tpu.pipeline_mode<synchronous>, transform_indices = @transform_6, window_bounds = array<i64: 1, 128>}, {transform_indices = @transform_7, window_bounds = array<i64: 16, 128>}]} {
    %c0_i32 = arith.constant 0 : i32
    %0 = arith.cmpi eq, %arg1, %c0_i32 : i32
    %1 = arith.extui %0 : i1 to i32
    %c0_i32_0 = arith.constant 0 : i32
    %2 = arith.cmpi ne, %1, %c0_i32_0 : i32
    scf.if %2 {
      %c0_14 = arith.constant 0 : index
      %c0_15 = arith.constant 0 : index
      %17 = vector.load %arg2[%c0_14, %c0_15] : memref<16x128xf32, #tpu.memory_space<vmem>>, vector<16x128xf32>
      %cst_16 = arith.constant dense<0.000000e+00> : vector<16xf32>
      %18 = vector.multi_reduction <add>, %17, %cst_16 [1] : vector<16x128xf32> to vector<16xf32>
      %19 = vector.shape_cast %18 : vector<16xf32> to vector<16x1xf32>
      %cst_17 = arith.constant 3.125000e-02 : f32
      %20 = vector.broadcast %cst_17 : f32 to vector<16x1xf32>
      %21 = arith.mulf %19, %20 : vector<16x1xf32>
      %22 = vector.broadcast %21 : vector<16x1xf32> to vector<16x128xf32>
      %23 = arith.subf %17, %22 : vector<16x128xf32>
      %24 = tpu.iota {dimensions = array<i32: 1>} : vector<16x128xi32>
      %c32_i32 = arith.constant 32 : i32
      %25 = vector.broadcast %c32_i32 : i32 to vector<16x128xi32>
      %26 = arith.cmpi slt, %24, %25 : vector<16x128xi32>
      %cst_18 = arith.constant 0.000000e+00 : f32
      %27 = vector.broadcast %cst_18 : f32 to vector<16x128xf32>
      %28 = arith.select %26, %23, %27 : vector<16x128xi1>, vector<16x128xf32>
      %29 = arith.mulf %28, %28 : vector<16x128xf32>
      %cst_19 = arith.constant dense<0.000000e+00> : vector<16xf32>
      %30 = vector.multi_reduction <add>, %29, %cst_19 [1] : vector<16x128xf32> to vector<16xf32>
      %31 = vector.shape_cast %30 : vector<16xf32> to vector<16x1xf32>
      %cst_20 = arith.constant 3.125000e-02 : f32
      %32 = vector.broadcast %cst_20 : f32 to vector<16x1xf32>
      %33 = arith.mulf %31, %32 : vector<16x1xf32>
      %cst_21 = arith.constant 9.99999997E-7 : f32
      %34 = vector.broadcast %cst_21 : f32 to vector<16x1xf32>
      %35 = arith.addf %33, %34 : vector<16x1xf32>
      %36 = math.rsqrt %35 : vector<16x1xf32>
      %37 = vector.broadcast %36 : vector<16x1xf32> to vector<16x128xf32>
      %38 = arith.mulf %28, %37 : vector<16x128xf32>
      %c0_22 = arith.constant 0 : index
      %c0_23 = arith.constant 0 : index
      %39 = vector.load %arg7[%c0_22, %c0_23] : memref<1x128xf32, #tpu.memory_space<vmem>>, vector<1x128xf32>
      %40 = vector.broadcast %39 : vector<1x128xf32> to vector<16x128xf32>
      %41 = arith.mulf %38, %40 : vector<16x128xf32>
      %c0_24 = arith.constant 0 : index
      %c0_25 = arith.constant 0 : index
      %42 = vector.load %arg8[%c0_24, %c0_25] : memref<1x128xf32, #tpu.memory_space<vmem>>, vector<1x128xf32>
      %43 = vector.broadcast %42 : vector<1x128xf32> to vector<16x128xf32>
      %44 = arith.addf %41, %43 : vector<16x128xf32>
      %45 = arith.truncf %44 : vector<16x128xf32> to vector<16x128xbf16>
      %c0_26 = arith.constant 0 : index
      %c0_27 = arith.constant 0 : index
      %46 = vector.load %arg10[%c0_26, %c0_27] : memref<16x128xbf16, #tpu.memory_space<vmem>>, vector<16x128xbf16>
      tpu.vector_store %arg10[%c0_26, %c0_27], %45 {strides = array<i32>} : memref<16x128xbf16, #tpu.memory_space<vmem>>, vector<16x128xbf16>,
      %c0_28 = arith.constant 0 : index
      %c0_29 = arith.constant 0 : index
      %47 = vector.load %arg6[%c0_28, %c0_29] : memref<1x128xf32, #tpu.memory_space<vmem>>, vector<1x128xf32>
      %48 = vector.broadcast %47 : vector<1x128xf32> to vector<16x128xf32>
      %49 = arith.addf %17, %48 : vector<16x128xf32>
      %c0_30 = arith.constant 0 : index
      %c0_31 = arith.constant 0 : index
      %50 = vector.load %arg9[%c0_30, %c0_31] : memref<16x128xf32, #tpu.memory_space<vmem>>, vector<16x128xf32>
      tpu.vector_store %arg9[%c0_30, %c0_31], %49 {strides = array<i32>} : memref<16x128xf32, #tpu.memory_space<vmem>>, vector<16x128xf32>,
    } else {
    }
    %c0 = arith.constant 0 : index
    %c0_1 = arith.constant 0 : index
    %3 = vector.load %arg10[%c0, %c0_1] : memref<16x128xbf16, #tpu.memory_space<vmem>>, vector<16x128xbf16>
    %c0_2 = arith.constant 0 : index
    %c0_3 = arith.constant 0 : index
    %4 = vector.load %arg3[%c0_2, %c0_3] : memref<128x128xbf16, #tpu.memory_space<vmem>>, vector<128x128xbf16>
    %cst = arith.constant dense<0.000000e+00> : vector<16x128xf32>
    %5 = tpu.matmul %3, %4, %cst {dimension_numbers = #tpu.dot_dimension_numbers<[1], [0], [0], [1], [0, 0, 1, 1], [], []>} : vector<16x128xbf16>, vector<128x128xbf16>, vector<16x128xf32> -> vector<16x128xf32>
    %c0_4 = arith.constant 0 : index
    %c0_5 = arith.constant 0 : index
    %6 = vector.load %arg4[%c0_4, %c0_5] : memref<1x128xf32, #tpu.memory_space<vmem>>, vector<1x128xf32>
    %7 = vector.broadcast %6 : vector<1x128xf32> to vector<16x128xf32>
    %8 = arith.addf %5, %7 : vector<16x128xf32>
    %cst_6 = arith.constant 0.000000e+00 : f32
    %9 = vector.broadcast %cst_6 : f32 to vector<16x128xf32>
    %10 = arith.maximumf %8, %9 : vector<16x128xf32>
    %c0_7 = arith.constant 0 : index
    %c0_8 = arith.constant 0 : index
    %11 = vector.load %arg9[%c0_7, %c0_8] : memref<16x128xf32, #tpu.memory_space<vmem>>, vector<16x128xf32>
    %12 = arith.truncf %10 : vector<16x128xf32> to vector<16x128xbf16>
    %c0_9 = arith.constant 0 : index
    %c0_10 = arith.constant 0 : index
    %13 = vector.load %arg5[%c0_9, %c0_10] : memref<128x128xbf16, #tpu.memory_space<vmem>>, vector<128x128xbf16>
    %cst_11 = arith.constant dense<0.000000e+00> : vector<16x128xf32>
    %14 = tpu.matmul %12, %13, %cst_11 {dimension_numbers = #tpu.dot_dimension_numbers<[1], [0], [0], [1], [0, 0, 1, 1], [], []>} : vector<16x128xbf16>, vector<128x128xbf16>, vector<16x128xf32> -> vector<16x128xf32>
    %15 = arith.addf %11, %14 : vector<16x128xf32>
    %c0_12 = arith.constant 0 : index
    %c0_13 = arith.constant 0 : index
    %16 = vector.load %arg9[%c0_12, %c0_13] : memref<16x128xf32, #tpu.memory_space<vmem>>, vector<16x128xf32>
    tpu.vector_store %arg9[%c0_12, %c0_13], %15 {strides = array<i32>} : memref<16x128xf32, #tpu.memory_space<vmem>>, vector<16x128xf32>,
    return
  }
  func.func @transform_0(%arg0: i32, %arg1: i32) -> (i32, i32) {
    %c0_i32 = arith.constant 0 : i32
    %c0_i32_0 = arith.constant 0 : i32
    return %arg0, %c0_i32 : i32, i32
  }
  func.func @transform_1(%arg0: i32, %arg1: i32) -> (i32, i32) {
    %c0_i32 = arith.constant 0 : i32
    %c0_i32_0 = arith.constant 0 : i32
    return %c0_i32, %arg1 : i32, i32
  }
  func.func @transform_2(%arg0: i32, %arg1: i32) -> (i32, i32) {
    %c0_i32 = arith.constant 0 : i32
    %c0_i32_0 = arith.constant 0 : i32
    return %c0_i32, %arg1 : i32, i32
  }
  func.func @transform_3(%arg0: i32, %arg1: i32) -> (i32, i32) {
    %c0_i32 = arith.constant 0 : i32
    %c0_i32_0 = arith.constant 0 : i32
    return %arg1, %c0_i32 : i32, i32
  }
  func.func @transform_4(%arg0: i32, %arg1: i32) -> (i32, i32) {
    %c0_i32 = arith.constant 0 : i32
    %c0_i32_0 = arith.constant 0 : i32
    %c0_i32_1 = arith.constant 0 : i32
    return %c0_i32, %c0_i32_0 : i32, i32
  }
  func.func @transform_5(%arg0: i32, %arg1: i32) -> (i32, i32) {
    %c0_i32 = arith.constant 0 : i32
    %c0_i32_0 = arith.constant 0 : i32
    %c0_i32_1 = arith.constant 0 : i32
    return %c0_i32, %c0_i32_0 : i32, i32
  }
  func.func @transform_6(%arg0: i32, %arg1: i32) -> (i32, i32) {
    %c0_i32 = arith.constant 0 : i32
    %c0_i32_0 = arith.constant 0 : i32
    %c0_i32_1 = arith.constant 0 : i32
    return %c0_i32, %c0_i32_0 : i32, i32
  }
  func.func @transform_7(%arg0: i32, %arg1: i32) -> (i32, i32) {
    %c0_i32 = arith.constant 0 : i32
    %c0_i32_0 = arith.constant 0 : i32
    return %arg0, %c0_i32 : i32, i32
  }
}

</mosaic_0001>

<llo_original>
// kernel: positionwise_feed_forward.1
$region0: #{positionwise_feed_forward.1}
  #allocation0 [shape = 'u32[]', space=smem, size = 0x4, offset = 0x4, fixed_abs, tag = 'smem constant byte address 0x4 - core index']
  #allocation1 [shape = 'u32[144,128]{1,0:T(1,128)}', space=vmem, size = 0x12000, scoped, tag = 'internal scratch']
  #allocation2 [shape = 'bf16[16,128]{1,0:T(16,128)(2,1)}', space=vmem, size = 0x1000, scoped, tag = 'scratch operand']
  %s0 = inlined_call_operand.vmem [shape: f32[16,128], index: 0, kind: input, shape index: {}]
  %s1 = inlined_call_operand.hbm [shape: bf16[128,128], index: 1, kind: input, shape index: {}]
  %s2 = inlined_call_operand.vmem [shape: f32[1,128], index: 2, kind: input, shape index: {}]
  %s3 = inlined_call_operand.hbm [shape: bf16[128,128], index: 3, kind: input, shape index: {}]
  %s4 = inlined_call_operand.vmem [shape: f32[1,128], index: 4, kind: input, shape index: {}]
  %s5 = inlined_call_operand.vmem [shape: f32[1,128], index: 5, kind: input, shape index: {}]
  %s6 = inlined_call_operand.vmem [shape: f32[1,128], index: 6, kind: input, shape index: {}]
  %s7 = inlined_call_operand.vmem [shape: f32[16,128], index: 7, kind: output, shape index: {}]
  %s8 = sld [smem:[#allocation0]]
  $region50: #{positionwise_feed_forward.1} parent=0
    _
  %s10 = ssub.s32 1, %s8
  %s11 = scalar_select 0, %s10, %s8
  $region1: #{positionwise_feed_forward.1} parent=0
    #allocation3 [shape = 'u8[32768]{0}', space=vmem, size = 0x8000, scoped, tag = 'input window, operand 1, single buffered']
    #allocation4 [shape = 's32[1]{0}', space=sflag, size = 0x4, scoped, tag = 'scoped memory for positionwise_feed_forward.1']
    #allocation5 [shape = 'u8[32768]{0}', space=vmem, size = 0x8000, scoped, tag = 'input window, operand 3, single buffered']
    #allocation6 [shape = 's32[1]{0}', space=sflag, size = 0x4, scoped, tag = 'scoped memory for positionwise_feed_forward.1']
    %12 = vsyncpa [#allocation4], 0
    %13 = vsyncpa [#allocation6], 0
    // Predicated region
    $region2: #{positionwise_feed_forward.1} parent=1 // pred_check
      _
    $region3: #{positionwise_feed_forward.1} parent=1 // pred_check_branch
      %15 = sbr.rel (0) target = $region5
    $region4: #{positionwise_feed_forward.1} parent=1 // pred_region
      _
    $region5: #{positionwise_feed_forward.1} parent=1 // pred_fallthru
      _
    // Predicated region
    $region6: #{positionwise_feed_forward.1} parent=1 // pred_check
      _
    $region7: #{positionwise_feed_forward.1} parent=1 // pred_check_branch
      %17 = sbr.rel (0) target = $region9
    $region8: #{positionwise_feed_forward.1} parent=1 // pred_region
      %s19 = ssub.s32 1024, 1024
      %20 = vsyncadd [#allocation4], %s19
      %s21 = sshll.u32 [#allocation3], 4
      %s22 = int_to_ptr.vmem [resolvable:$true] %s21
      %27 = dma.hbm_to_vmem [thread:$0]  %s1, 1024, %s22, [#allocation4], 64, 64, 4
    $region9: #{positionwise_feed_forward.1} parent=1 // pred_fallthru
      _
    // Predicated region
    $region10: #{positionwise_feed_forward.1} parent=1 // pred_check
      _
    $region11: #{positionwise_feed_forward.1} parent=1 // pred_check_branch
      %29 = sbr.rel (0) target = $region13
    $region12: #{positionwise_feed_forward.1} parent=1 // pred_region
      _
    $region13: #{positionwise_feed_forward.1} parent=1 // pred_fallthru
      _
    // Predicated region
    $region14: #{positionwise_feed_forward.1} parent=1 // pred_check
      _
    $region15: #{positionwise_feed_forward.1} parent=1 // pred_check_branch
      %31 = sbr.rel (0) target = $region17
    $region16: #{positionwise_feed_forward.1} parent=1 // pred_region
      %s33 = ssub.s32 1024, 1024
      %34 = vsyncadd [#allocation6], %s33
      %s35 = sshll.u32 [#allocation5], 4
      %s36 = int_to_ptr.vmem [resolvable:$true] %s35
      %41 = dma.hbm_to_vmem [thread:$0]  %s3, 1024, %s36, [#allocation6], 64, 64, 4
    $region17: #{positionwise_feed_forward.1} parent=1 // pred_fallthru
      _
    // Predicated region
    $region18: #{positionwise_feed_forward.1} parent=1 // pred_check
      _
    $region19: #{positionwise_feed_forward.1} parent=1 // pred_check_branch
      %43 = sbr.rel (0) target = $region21
    $region20: #{positionwise_feed_forward.1} parent=1 // pred_region
      _
    $region21: #{positionwise_feed_forward.1} parent=1 // pred_fallthru
      _
    // Predicated region
    $region22: #{positionwise_feed_forward.1} parent=1 // pred_check
      _
    $region23: #{positionwise_feed_forward.1} parent=1 // pred_check_branch
      %45 = sbr.rel (0) target = $region25
    $region24: #{positionwise_feed_forward.1} parent=1 // pred_region
      _
    $region25: #{positionwise_feed_forward.1} parent=1 // pred_fallthru
      _
    // Predicated region
    $region26: #{positionwise_feed_forward.1} parent=1 // pred_check
      _
    $region27: #{positionwise_feed_forward.1} parent=1 // pred_check_branch
      %47 = sbr.rel (0) target = $region29
    $region28: #{positionwise_feed_forward.1} parent=1 // pred_region
      _
    $region29: #{positionwise_feed_forward.1} parent=1 // pred_fallthru
      _
    // Predicated region
    $region30: #{positionwise_feed_forward.1} parent=1 // pred_check
      _
    $region31: #{positionwise_feed_forward.1} parent=1 // pred_check_branch
      %49 = sbr.rel (0) target = $region33
    $region32: #{positionwise_feed_forward.1} parent=1 // pred_region
      %50 = dma.done [#allocation4], 1024
    $region33: #{positionwise_feed_forward.1} parent=1 // pred_fallthru
      _
    // Predicated region
    $region34: #{positionwise_feed_forward.1} parent=1 // pred_check
      _
    $region35: #{positionwise_feed_forward.1} parent=1 // pred_check_branch
      %52 = sbr.rel (0) target = $region37
    $region36: #{positionwise_feed_forward.1} parent=1 // pred_region
      %53 = dma.done [#allocation6], 1024
    $region37: #{positionwise_feed_forward.1} parent=1 // pred_fallthru
      _
    %p55 = scmp.eq.s32.totalorder 0, 0
    // Predicated region
    $region38: #{positionwise_feed_forward.1} parent=1 // pred_check
      %p56 = pneg %p55
    $region39: #{positionwise_feed_forward.1} parent=1 // pred_check_branch
      %58 = sbr.rel (%p56) target = $region41
    $region40: #{positionwise_feed_forward.1} parent=1 // pred_region
      %v59 = vld [vmem:[%s0] sm:$0xff]
      %v60 = vld [vmem:[%s0 + $0x8] sm:$0xff]
      %61 = vadd.xlane.f32.xlu0 %v59
      %v62 = vpop.xlane.xlu0 %61
      %63 = vadd.xlane.f32.xlu0 %v60
      %v64 = vpop.xlane.xlu0 %63
      %v65 = vmul.f32 %v62, 0.03125
      %v66 = vmul.f32 %v64, 0.03125
      %v67 = vsub.f32 %v59, %v65
      %v68 = vsub.f32 %v60, %v66
      %v69 = vlaneseq
      %v70 = vand.u32 %v69, 127
      %vm71 = vcmp.lt.s32.totalorder %v70, 32
      %v72 = vsel %vm71, %v67, 0.0
      %v73 = vsel %vm71, %v68, 0.0
      %v74 = vmul.f32 %v72, %v72
      %v75 = vmul.f32 %v73, %v73
      %76 = vadd.xlane.f32.xlu0 %v74
      %v77 = vpop.xlane.xlu0 %76
      %78 = vadd.xlane.f32.xlu0 %v75
      %v79 = vpop.xlane.xlu0 %78
      %v80 = vmul.f32 %v77, 0.03125
      %v81 = vmul.f32 %v79, 0.03125
      %v82 = vadd.f32 %v80, 1e-06
      %v83 = vadd.f32 %v81, 1e-06
      %v84 = vrsqrt.pop %v82
      %v85 = vrsqrt.pop %v83
      %v86 = vmul.f32 %v72, %v84
      %v87 = vmul.f32 %v73, %v85
      %v88 = vld [vmem:[%s5] sm:$0x1]
      %v90 = vlaneseq
      %v91 = vshrl.u32 %v90, 7
      %v92 = vsub.s32 0, %v91
      %v93 = vrot.slane %v88, %v92
      %v95 = vmul.f32 %v86, %v93
      %v96 = vmul.f32 %v87, %v93
      %v97 = vld [vmem:[%s6] sm:$0x1]
      %v99 = vlaneseq
      %v100 = vshrl.u32 %v99, 7
      %v101 = vsub.s32 0, %v100
      %v102 = vrot.slane %v97, %v101
      %v104 = vadd.f32 %v95, %v102
      %v105 = vadd.f32 %v96, %v102
      %v106 = vpack.c.bf16 %v105, %v104
      %107 = vst [vmem:[#allocation2] sm:$0xff] %v106
      %v108 = vld [vmem:[%s4] sm:$0x1]
      %v110 = vlaneseq
      %v111 = vshrl.u32 %v110, 7
      %v112 = vsub.s32 0, %v111
      %v113 = vrot.slane %v108, %v112
      %v115 = vadd.f32 %v59, %v113
      %v116 = vadd.f32 %v60, %v113
      %117 = vst [vmem:[%s7] sm:$0xff] %v115
      %118 = vst [vmem:[%s7 + $0x8] sm:$0xff] %v116
    $region41: #{positionwise_feed_forward.1} parent=1 // pred_fallthru
      _
    %v119 = vld [vmem:[#allocation2] sm:$0xff]
    %v120 = vld [vmem:[#allocation3] sm:$0xf]
    %v121 = vld [vmem:[#allocation3 + $0x4] sm:$0xf]
    %v122 = vld [vmem:[#allocation3 + $0x8] sm:$0xf]
    %v123 = vld [vmem:[#allocation3 + $0xc] sm:$0xf]
    %v124 = vld [vmem:[#allocation3 + $0x10] sm:$0xf]
    %v125 = vld [vmem:[#allocation3 + $0x14] sm:$0xf]
    %v126 = vld [vmem:[#allocation3 + $0x18] sm:$0xf]
    %v127 = vld [vmem:[#allocation3 + $0x1c] sm:$0xf]
    %v128 = vld [vmem:[#allocation3 + $0x20] sm:$0xf]
    %v129 = vld [vmem:[#allocation3 + $0x24] sm:$0xf]
    %v130 = vld [vmem:[#allocation3 + $0x28] sm:$0xf]
    %v131 = vld [vmem:[#allocation3 + $0x2c] sm:$0xf]
    %v132 = vld [vmem:[#allocation3 + $0x30] sm:$0xf]
    %v133 = vld [vmem:[#allocation3 + $0x34] sm:$0xf]
    %v134 = vld [vmem:[#allocation3 + $0x38] sm:$0xf]
    %v135 = vld [vmem:[#allocation3 + $0x3c] sm:$0xf]
    %v136 = vld [vmem:[%s2] sm:$0x1]
    %v138 = vlaneseq
    %v139 = vshrl.u32 %v138, 7
    %v140 = vsub.s32 0, %v139
    %v141 = vrot.slane %v136, %v140
    %v159 = vunpack.c.l.b16 %v120
    %v160 = vunpack.c.l.b16 %v121
    %v161 = vunpack.c.l.b16 %v122
    %v162 = vunpack.c.l.b16 %v123
    %v163 = vunpack.c.l.b16 %v124
    %v164 = vunpack.c.l.b16 %v125
    %v165 = vunpack.c.l.b16 %v126
    %v166 = vunpack.c.l.b16 %v127
    %v167 = vunpack.c.l.b16 %v128
    %v168 = vunpack.c.l.b16 %v129
    %v169 = vunpack.c.l.b16 %v130
    %v170 = vunpack.c.l.b16 %v131
    %v171 = vunpack.c.l.b16 %v132
    %v172 = vunpack.c.l.b16 %v133
    %v173 = vunpack.c.l.b16 %v134
    %v174 = vunpack.c.l.b16 %v135
    %v175 = vpack.c.b16 %v160, %v159
    %v176 = vpack.c.b16 %v162, %v161
    %v177 = vpack.c.b16 %v164, %v163
    %v178 = vpack.c.b16 %v166, %v165
    %v179 = vpack.c.b16 %v168, %v167
    %v180 = vpack.c.b16 %v170, %v169
    %v181 = vpack.c.b16 %v172, %v171
    %v182 = vpack.c.b16 %v174, %v173
    %191 = vmatprep.subr.bf16.mxu0 0
    %192 = vmatpush1.bf16.msra.mxu0 %v175
    %193 = vmatprep.subr.bf16.mxu0 0
    %194 = vmatpush1.bf16.msra.mxu0 %v176
    %195 = vmatprep.subr.bf16.mxu0 0
    %196 = vmatpush1.bf16.msra.mxu0 %v177
    %197 = vmatprep.subr.bf16.mxu0 0
    %198 = vmatpush1.bf16.msra.mxu0 %v178
    %199 = vmatprep.subr.bf16.mxu0 0
    %200 = vmatpush1.bf16.msra.mxu0 %v179
    %201 = vmatprep.subr.bf16.mxu0 0
    %202 = vmatpush1.bf16.msra.mxu0 %v180
    %203 = vmatprep.subr.bf16.mxu0 0
    %204 = vmatpush1.bf16.msra.mxu0 %v181
    %205 = vmatprep.subr.bf16.mxu0 0
    %206 = vmatpush1.bf16.msra.mxu0 %v182
    %207 = vmatprep.subr.bf16.mxu0 0
    %208 = vmatpush1.bf16.msra.mxu0 0
    %209 = vmatprep.subr.bf16.mxu0 0
    %210 = vmatpush1.bf16.msra.mxu0 0
    %211 = vmatprep.subr.bf16.mxu0 0
    %212 = vmatpush1.bf16.msra.mxu0 0
    %213 = vmatprep.subr.bf16.mxu0 0
    %214 = vmatpush1.bf16.msra.mxu0 0
    %215 = vmatprep.subr.bf16.mxu0 0
    %216 = vmatpush1.bf16.msra.mxu0 0
    %217 = vmatprep.subr.bf16.mxu0 0
    %218 = vmatpush1.bf16.msra.mxu0 0
    %219 = vmatprep.subr.bf16.mxu0 0
    %220 = vmatpush1.bf16.msra.mxu0 0
    %221 = vmatprep.subr.bf16.mxu0 0
    %222 = vmatpush1.bf16.msra.mxu0 0
    %223 = vmatprep.mubr.bf16.mxu0 0
    %224 = vmatmul.mubr.bf16.gmra.mrb[0].mxu0 %v119
    %v225 = vpop.f32.mrb[0].mxu0
    %v226 = vadd.f32 %v141, %v225
    %v227 = vpop.f32.mrb[0].mxu0
    %v228 = vpop.f32.mrb[0].mxu0
    %v229 = vadd.f32 %v141, %v228
    %v230 = vpop.f32.mrb[0].mxu0
    %231 = vdwg.mxu0
    %v232 = vmax.f32 %v226, 0.0
    %v233 = vmax.f32 %v229, 0.0
    %v234 = vld [vmem:[%s7] sm:$0xff]
    %v235 = vld [vmem:[%s7 + $0x8] sm:$0xff]
    %v236 = vpack.c.bf16 %v233, %v232
    %v237 = vld [vmem:[#allocation5] sm:$0xf]
    %v238 = vld [vmem:[#allocation5 + $0x4] sm:$0xf]
    %v239 = vld [vmem:[#allocation5 + $0x8] sm:$0xf]
    %v240 = vld [vmem:[#allocation5 + $0xc] sm:$0xf]
    %v241 = vld [vmem:[#allocation5 + $0x10] sm:$0xf]
    %v242 = vld [vmem:[#allocation5 + $0x14] sm:$0xf]
    %v243 = vld [vmem:[#allocation5 + $0x18] sm:$0xf]
    %v244 = vld [vmem:[#allocation5 + $0x1c] sm:$0xf]
    %v245 = vld [vmem:[#allocation5 + $0x20] sm:$0xf]
    %v246 = vld [vmem:[#allocation5 + $0x24] sm:$0xf]
    %v247 = vld [vmem:[#allocation5 + $0x28] sm:$0xf]
    %v248 = vld [vmem:[#allocation5 + $0x2c] sm:$0xf]
    %v249 = vld [vmem:[#allocation5 + $0x30] sm:$0xf]
    %v250 = vld [vmem:[#allocation5 + $0x34] sm:$0xf]
    %v251 = vld [vmem:[#allocation5 + $0x38] sm:$0xf]
    %v252 = vld [vmem:[#allocation5 + $0x3c] sm:$0xf]
    %v269 = vunpack.c.l.b16 %v237
    %v270 = vunpack.c.l.b16 %v238
    %v271 = vunpack.c.l.b16 %v239
    %v272 = vunpack.c.l.b16 %v240
    %v273 = vunpack.c.l.b16 %v241
    %v274 = vunpack.c.l.b16 %v242
    %v275 = vunpack.c.l.b16 %v243
    %v276 = vunpack.c.l.b16 %v244
    %v277 = vunpack.c.l.b16 %v245
    %v278 = vunpack.c.l.b16 %v246
    %v279 = vunpack.c.l.b16 %v247
    %v280 = vunpack.c.l.b16 %v248
    %v281 = vunpack.c.l.b16 %v249
    %v282 = vunpack.c.l.b16 %v250
    %v283 = vunpack.c.l.b16 %v251
    %v284 = vunpack.c.l.b16 %v252
    %v285 = vpack.c.b16 %v270, %v269
    %v286 = vpack.c.b16 %v272, %v271
    %v287 = vpack.c.b16 %v274, %v273
    %v288 = vpack.c.b16 %v276, %v275
    %v289 = vpack.c.b16 %v278, %v277
    %v290 = vpack.c.b16 %v280, %v279
    %v291 = vpack.c.b16 %v282, %v281
    %v292 = vpack.c.b16 %v284, %v283
    %301 = vmatprep.subr.bf16.mxu0 0
    %302 = vmatpush1.bf16.msra.mxu0 %v285
    %303 = vmatprep.subr.bf16.mxu0 0
    %304 = vmatpush1.bf16.msra.mxu0 %v286
    %305 = vmatprep.subr.bf16.mxu0 0
    %306 = vmatpush1.bf16.msra.mxu0 %v287
    %307 = vmatprep.subr.bf16.mxu0 0
    %308 = vmatpush1.bf16.msra.mxu0 %v288
    %309 = vmatprep.subr.bf16.mxu0 0
    %310 = vmatpush1.bf16.msra.mxu0 %v289
    %311 = vmatprep.subr.bf16.mxu0 0
    %312 = vmatpush1.bf16.msra.mxu0 %v290
    %313 = vmatprep.subr.bf16.mxu0 0
    %314 = vmatpush1.bf16.msra.mxu0 %v291
    %315 = vmatprep.subr.bf16.mxu0 0
    %316 = vmatpush1.bf16.msra.mxu0 %v292
    %317 = vmatprep.subr.bf16.mxu0 0
    %318 = vmatpush1.bf16.msra.mxu0 0
    %319 = vmatprep.subr.bf16.mxu0 0
    %320 = vmatpush1.bf16.msra.mxu0 0
    %321 = vmatprep.subr.bf16.mxu0 0
    %322 = vmatpush1.bf16.msra.mxu0 0
    %323 = vmatprep.subr.bf16.mxu0 0
    %324 = vmatpush1.bf16.msra.mxu0 0
    %325 = vmatprep.subr.bf16.mxu0 0
    %326 = vmatpush1.bf16.msra.mxu0 0
    %327 = vmatprep.subr.bf16.mxu0 0
    %328 = vmatpush1.bf16.msra.mxu0 0
    %329 = vmatprep.subr.bf16.mxu0 0
    %330 = vmatpush1.bf16.msra.mxu0 0
    %331 = vmatprep.subr.bf16.mxu0 0
    %332 = vmatpush1.bf16.msra.mxu0 0
    %333 = vmatprep.mubr.bf16.mxu0 0
    %334 = vmatmul.mubr.bf16.gmra.mrb[0].mxu0 %v236
    %v335 = vpop.f32.mrb[0].mxu0
    %v336 = vadd.f32 0.0, %v335
    %v337 = vpop.f32.mrb[0].mxu0
    %v338 = vpop.f32.mrb[0].mxu0
    %v339 = vadd.f32 0.0, %v338
    %v340 = vpop.f32.mrb[0].mxu0
    %341 = vdwg.mxu0
    %v342 = vadd.f32 %v234, %v336
    %v343 = vadd.f32 %v235, %v339
    %344 = vst [vmem:[%s7] sm:$0xff] %v342
    %345 = vst [vmem:[%s7 + $0x8] sm:$0xff] %v343
    // Predicated region
    $region42: #{positionwise_feed_forward.1} parent=1 // pred_check
      _
    $region43: #{positionwise_feed_forward.1} parent=1 // pred_check_branch
      %347 = sbr.rel (0) target = $region45
    $region44: #{positionwise_feed_forward.1} parent=1 // pred_region
      _
    $region45: #{positionwise_feed_forward.1} parent=1 // pred_fallthru
      _
    // Predicated region
    $region46: #{positionwise_feed_forward.1} parent=1 // pred_check
      _
    $region47: #{positionwise_feed_forward.1} parent=1 // pred_check_branch
      %349 = sbr.rel (0) target = $region49
    $region48: #{positionwise_feed_forward.1} parent=1 // pred_region
      _
    $region49: #{positionwise_feed_forward.1} parent=1 // pred_fallthru
      _
    %350 = vsyncpa [#allocation4], 1
    %351 = vsyncpa [#allocation6], 1

</llo_original>
